<compile_context>
chip_gen: v7x
topology: tpu7x:2x2x1
jax: 0.10.0
libtpu: 0.0.40
codegen_flags: <defaults>
</compile_context>

<pallas_src>
import math
import functools

import jax
import jax.numpy as jnp
import numpy as np
from jax.experimental import pallas as pl
from jax.experimental.pallas import tpu as pltpu


def _layer_norm(v, g, b, eps):
    mu = jnp.mean(v, axis=-1, keepdims=True)
    var = jnp.mean(jnp.square(v - mu), axis=-1, keepdims=True)
    return (v - mu) * jax.lax.rsqrt(var + eps) * g + b


def _gelu_exact(x):
    # matches torch erf-gelu: x * 0.5 * (1 + erf(x / sqrt(2)))
    return x * 0.5 * (1.0 + jax.lax.erf(x * (1.0 / math.sqrt(2.0))))


def layer_kernel(x_ref, cw_ref, g1_ref, be1_ref, w1_ref, b1_ref,
                 w2_ref, b2_ref, g2_ref, be2_ref, o_ref, *, eps, batch, seq):
    # x_ref is the batch-flattened activation: (B*S, H)
    x = x_ref[...]                                   # (B*S, H) f32
    cw = cw_ref[...]                                 # (K, H)
    K = cw.shape[0]
    H = x.shape[-1]
    scale = 1.0 / math.sqrt(seq)

    # Hoisted sublane-broadcasts of the K conv taps (K is tiny & static).
    taps = [jnp.broadcast_to(cw[k:k + 1, :], (seq, H)) for k in range(K)]

    # ---- FFT filter == depthwise circular convolution / sqrt(S), per batch ----
    rows = []
    for b in range(batch):                           # batch is tiny & static -> unrolled
        xb = x[b * seq:(b + 1) * seq, :]             # 8-aligned static slice, (S, H)
        acc = taps[0] * xb
        for k in range(1, K):                        # circular shift via XLU rotate
            acc = acc + taps[k] * pltpu.roll(xb, shift=k, axis=0)
        rows.append(acc * scale + xb)                # conv output + residual
    yx = jnp.concatenate(rows, axis=0)               # (B*S, H)

    # dropout(p) in eval mode == identity
    h1 = _layer_norm(yx, g1_ref[...], be1_ref[...], eps)

    # ---- Intermediate: Linear -> gelu -> Linear -> (+res) -> LayerNorm ----
    # Single pair of matmuls over the merged (B*S) row axis.
    z = jnp.dot(h1, w1_ref[...], preferred_element_type=jnp.float32) + b1_ref[...]
    z = _gelu_exact(z)
    z = jnp.dot(z, w2_ref[...], preferred_element_type=jnp.float32) + b2_ref[...]
    o_ref[...] = _layer_norm(z + h1, g2_ref[...], be2_ref[...], eps)


def layer_forward(x, params, *, eps):
    B, S, H = x.shape
    K = params["conv_w"].shape[0]
    assert K <= S, "conv taps must not exceed the sequence length"

    p_order = ("conv_w", "ln1_g", "ln1_b", "w1", "b1", "w2", "b2", "ln2_g", "ln2_b")
    p_list = [params[k] for k in p_order]

    x_flat = x.reshape(B * S, H)                     # free, contiguous row-major
    vmem_spec = pl.BlockSpec(memory_space=pltpu.MemorySpace.VMEM)

    out_flat = pl.pallas_call(
        functools.partial(layer_kernel, eps=eps, batch=B, seq=S),
        out_shape=jax.ShapeDtypeStruct((B * S, H), jnp.float32),
        in_specs=[vmem_spec] * (1 + len(p_list)),
        out_specs=vmem_spec,
    )(x_flat, *p_list)
    return out_flat.reshape(B, S, H)


def ref_forward(x, p, *, eps):
    """Pure-JAX reference mirroring the PyTorch forward (FFT path, eval mode)."""
    B, S, H = x.shape
    K = p["conv_w"].shape[0]
    w_pad = jnp.concatenate(
        [p["conv_w"][None], jnp.zeros((1, S - K, H), x.dtype)], axis=1)    # (1, S, H)
    xf = jnp.fft.rfft(x, axis=1, norm="ortho")
    wf = jnp.fft.rfft(w_pad, axis=1, norm="ortho")
    y = jnp.fft.irfft(xf * wf, n=S, axis=1, norm="ortho").astype(jnp.float32)
    h1 = _layer_norm(y + x, p["ln1_g"], p["ln1_b"], eps)
    z = _gelu_exact(h1 @ p["w1"] + p["b1"])
    z = z @ p["w2"] + p["b2"]
    return _layer_norm(z + h1, p["ln2_g"], p["ln2_b"], eps)


if __name__ == "__main__":
    # module config (small): conv_size=3, padding_mode=2, dropout=0.0 (eval),
    # hidden_size=32, inner_size=64, hidden_act='gelu', eps=1e-12, max_seq_len=8
    B, S, H, I, K = 2, 8, 32, 64, 3
    EPS = 1e-12

    key = jax.random.PRNGKey(0)
    ks = jax.random.split(key, 6)
    params = {
        "conv_w": 0.02 * jax.random.normal(ks[0], (K, H), jnp.float32),
        "ln1_g": jnp.ones((1, H), jnp.float32),
        "ln1_b": jnp.zeros((1, H), jnp.float32),
        "w1": 0.02 * jax.random.normal(ks[1], (H, I), jnp.float32),
        "b1": 0.02 * jax.random.normal(ks[2], (1, I), jnp.float32),
        "w2": 0.02 * jax.random.normal(ks[3], (I, H), jnp.float32),
        "b2": 0.02 * jax.random.normal(ks[4], (1, H), jnp.float32),
        "ln2_g": jnp.ones((1, H), jnp.float32),
        "ln2_b": jnp.zeros((1, H), jnp.float32),
    }
    x = jax.random.normal(ks[5], (B, S, H), jnp.float32)

    out = jax.block_until_ready(layer_forward(x, params, eps=EPS))
    ref = jax.block_until_ready(ref_forward(x, params, eps=EPS))

    np.testing.assert_allclose(np.asarray(out), np.asarray(ref), rtol=1e-4, atol=1e-4)
    print("KERNEL_OK")
</pallas_src>

<mosaic_0001>
module attributes {stable_mosaic.version = 11 : i64} {
  func.func @layer_kernel(%arg0: memref<16x32xf32, #tpu.memory_space<vmem>>, %arg1: memref<3x32xf32, #tpu.memory_space<vmem>>, %arg2: memref<1x32xf32, #tpu.memory_space<vmem>>, %arg3: memref<1x32xf32, #tpu.memory_space<vmem>>, %arg4: memref<32x64xf32, #tpu.memory_space<vmem>>, %arg5: memref<1x64xf32, #tpu.memory_space<vmem>>, %arg6: memref<64x32xf32, #tpu.memory_space<vmem>>, %arg7: memref<1x32xf32, #tpu.memory_space<vmem>>, %arg8: memref<1x32xf32, #tpu.memory_space<vmem>>, %arg9: memref<1x32xf32, #tpu.memory_space<vmem>>, %arg10: memref<16x32xf32, #tpu.memory_space<vmem>>) attributes {dimension_semantics = [], scalar_prefetch = 0 : i64, scratch_operands = 0 : i64, tpu.core_type = #tpu.core_type<tc>} {
    %c0 = arith.constant 0 : index
    %c0_0 = arith.constant 0 : index
    %0 = vector.load %arg0[%c0, %c0_0] : memref<16x32xf32, #tpu.memory_space<vmem>>, vector<16x32xf32>
    %c0_1 = arith.constant 0 : index
    %c0_2 = arith.constant 0 : index
    %1 = vector.load %arg1[%c0_1, %c0_2] : memref<3x32xf32, #tpu.memory_space<vmem>>, vector<3x32xf32>
    %2 = vector.extract_strided_slice %1 {offsets = [0, 0], sizes = [1, 32], strides = [1, 1]} : vector<3x32xf32> to vector<1x32xf32>
    %3 = vector.shape_cast %2 : vector<1x32xf32> to vector<1x32xf32>
    %4 = vector.broadcast %3 : vector<1x32xf32> to vector<8x32xf32>
    %5 = vector.extract_strided_slice %1 {offsets = [1, 0], sizes = [1, 32], strides = [1, 1]} : vector<3x32xf32> to vector<1x32xf32>
    %6 = vector.shape_cast %5 : vector<1x32xf32> to vector<1x32xf32>
    %7 = vector.broadcast %6 : vector<1x32xf32> to vector<8x32xf32>
    %8 = vector.extract_strided_slice %1 {offsets = [2, 0], sizes = [1, 32], strides = [1, 1]} : vector<3x32xf32> to vector<1x32xf32>
    %9 = vector.shape_cast %8 : vector<1x32xf32> to vector<1x32xf32>
    %10 = vector.broadcast %9 : vector<1x32xf32> to vector<8x32xf32>
    %11 = vector.extract_strided_slice %0 {offsets = [0, 0], sizes = [8, 32], strides = [1, 1]} : vector<16x32xf32> to vector<8x32xf32>
    %12 = arith.mulf %4, %11 : vector<8x32xf32>
    %c1_i32 = arith.constant 1 : i32
    %13 = tpu.dynamic_rotate %11 by %c1_i32 dim 0 : vector<8x32xf32>, i32 -> vector<8x32xf32>
    %14 = arith.mulf %7, %13 : vector<8x32xf32>
    %15 = arith.addf %12, %14 : vector<8x32xf32>
    %c2_i32 = arith.constant 2 : i32
    %16 = tpu.dynamic_rotate %11 by %c2_i32 dim 0 : vector<8x32xf32>, i32 -> vector<8x32xf32>
    %17 = arith.mulf %10, %16 : vector<8x32xf32>
    %18 = arith.addf %15, %17 : vector<8x32xf32>
    %cst = arith.constant 0.353553385 : f32
    %19 = vector.broadcast %cst : f32 to vector<8x32xf32>
    %20 = arith.mulf %18, %19 : vector<8x32xf32>
    %21 = arith.addf %20, %11 : vector<8x32xf32>
    %22 = vector.extract_strided_slice %0 {offsets = [8, 0], sizes = [8, 32], strides = [1, 1]} : vector<16x32xf32> to vector<8x32xf32>
    %23 = arith.mulf %4, %22 : vector<8x32xf32>
    %c1_i32_3 = arith.constant 1 : i32
    %24 = tpu.dynamic_rotate %22 by %c1_i32_3 dim 0 : vector<8x32xf32>, i32 -> vector<8x32xf32>
    %25 = arith.mulf %7, %24 : vector<8x32xf32>
    %26 = arith.addf %23, %25 : vector<8x32xf32>
    %c2_i32_4 = arith.constant 2 : i32
    %27 = tpu.dynamic_rotate %22 by %c2_i32_4 dim 0 : vector<8x32xf32>, i32 -> vector<8x32xf32>
    %28 = arith.mulf %10, %27 : vector<8x32xf32>
    %29 = arith.addf %26, %28 : vector<8x32xf32>
    %cst_5 = arith.constant 0.353553385 : f32
    %30 = vector.broadcast %cst_5 : f32 to vector<8x32xf32>
    %31 = arith.mulf %29, %30 : vector<8x32xf32>
    %32 = arith.addf %31, %22 : vector<8x32xf32>
    %33 = tpu.concatenate %21, %32 in 0 : vector<8x32xf32>, vector<8x32xf32> -> vector<16x32xf32>
    %c0_6 = arith.constant 0 : index
    %c0_7 = arith.constant 0 : index
    %34 = vector.load %arg2[%c0_6, %c0_7] : memref<1x32xf32, #tpu.memory_space<vmem>>, vector<1x32xf32>
    %c0_8 = arith.constant 0 : index
    %c0_9 = arith.constant 0 : index
    %35 = vector.load %arg3[%c0_8, %c0_9] : memref<1x32xf32, #tpu.memory_space<vmem>>, vector<1x32xf32>
    %cst_10 = arith.constant dense<0.000000e+00> : vector<16xf32>
    %36 = vector.multi_reduction <add>, %33, %cst_10 [1] : vector<16x32xf32> to vector<16xf32>
    %37 = vector.shape_cast %36 : vector<16xf32> to vector<16x1xf32>
    %cst_11 = arith.constant 3.200000e+01 : f32
    %38 = vector.broadcast %cst_11 : f32 to vector<16x1xf32>
    %39 = arith.divf %37, %38 : vector<16x1xf32>
    %40 = vector.broadcast %39 : vector<16x1xf32> to vector<16x32xf32>
    %41 = arith.subf %33, %40 : vector<16x32xf32>
    %42 = arith.mulf %41, %41 : vector<16x32xf32>
    %cst_12 = arith.constant dense<0.000000e+00> : vector<16xf32>
    %43 = vector.multi_reduction <add>, %42, %cst_12 [1] : vector<16x32xf32> to vector<16xf32>
    %44 = vector.shape_cast %43 : vector<16xf32> to vector<16x1xf32>
    %cst_13 = arith.constant 3.200000e+01 : f32
    %45 = vector.broadcast %cst_13 : f32 to vector<16x1xf32>
    %46 = arith.divf %44, %45 : vector<16x1xf32>
    %47 = vector.broadcast %39 : vector<16x1xf32> to vector<16x32xf32>
    %48 = arith.subf %33, %47 : vector<16x32xf32>
    %cst_14 = arith.constant 9.99999996E-13 : f32
    %49 = vector.broadcast %cst_14 : f32 to vector<16x1xf32>
    %50 = arith.addf %46, %49 : vector<16x1xf32>
    %51 = math.rsqrt %50 : vector<16x1xf32>
    %52 = vector.broadcast %51 : vector<16x1xf32> to vector<16x32xf32>
    %53 = arith.mulf %48, %52 : vector<16x32xf32>
    %54 = vector.broadcast %34 : vector<1x32xf32> to vector<16x32xf32>
    %55 = arith.mulf %53, %54 : vector<16x32xf32>
    %56 = vector.broadcast %35 : vector<1x32xf32> to vector<16x32xf32>
    %57 = arith.addf %55, %56 : vector<16x32xf32>
    %c0_15 = arith.constant 0 : index
    %c0_16 = arith.constant 0 : index
    %58 = vector.load %arg4[%c0_15, %c0_16] : memref<32x64xf32, #tpu.memory_space<vmem>>, vector<32x64xf32>
    %cst_17 = arith.constant dense<0.000000e+00> : vector<16x64xf32>
    %59 = tpu.matmul %57, %58, %cst_17 {dimension_numbers = #tpu.dot_dimension_numbers<[1], [0], [0], [1], [0, 0, 1, 1], [], []>} : vector<16x32xf32>, vector<32x64xf32>, vector<16x64xf32> -> vector<16x64xf32>
    %c0_18 = arith.constant 0 : index
    %c0_19 = arith.constant 0 : index
    %60 = vector.load %arg5[%c0_18, %c0_19] : memref<1x64xf32, #tpu.memory_space<vmem>>, vector<1x64xf32>
    %61 = vector.broadcast %60 : vector<1x64xf32> to vector<16x64xf32>
    %62 = arith.addf %59, %61 : vector<16x64xf32>
    %cst_20 = arith.constant 5.000000e-01 : f32
    %63 = vector.broadcast %cst_20 : f32 to vector<16x64xf32>
    %64 = arith.mulf %62, %63 : vector<16x64xf32>
    %cst_21 = arith.constant 0.707106769 : f32
    %65 = vector.broadcast %cst_21 : f32 to vector<16x64xf32>
    %66 = arith.mulf %62, %65 : vector<16x64xf32>
    %67 = math.erf %66 : vector<16x64xf32>
    %cst_22 = arith.constant 1.000000e+00 : f32
    %68 = vector.broadcast %cst_22 : f32 to vector<16x64xf32>
    %69 = arith.addf %68, %67 : vector<16x64xf32>
    %70 = arith.mulf %64, %69 : vector<16x64xf32>
    %c0_23 = arith.constant 0 : index
    %c0_24 = arith.constant 0 : index
    %71 = vector.load %arg6[%c0_23, %c0_24] : memref<64x32xf32, #tpu.memory_space<vmem>>, vector<64x32xf32>
    %cst_25 = arith.constant dense<0.000000e+00> : vector<16x32xf32>
    %72 = tpu.matmul %70, %71, %cst_25 {dimension_numbers = #tpu.dot_dimension_numbers<[1], [0], [0], [1], [0, 0, 1, 1], [], []>} : vector<16x64xf32>, vector<64x32xf32>, vector<16x32xf32> -> vector<16x32xf32>
    %c0_26 = arith.constant 0 : index
    %c0_27 = arith.constant 0 : index
    %73 = vector.load %arg7[%c0_26, %c0_27] : memref<1x32xf32, #tpu.memory_space<vmem>>, vector<1x32xf32>
    %74 = vector.broadcast %73 : vector<1x32xf32> to vector<16x32xf32>
    %75 = arith.addf %72, %74 : vector<16x32xf32>
    %76 = arith.addf %75, %57 : vector<16x32xf32>
    %c0_28 = arith.constant 0 : index
    %c0_29 = arith.constant 0 : index
    %77 = vector.load %arg8[%c0_28, %c0_29] : memref<1x32xf32, #tpu.memory_space<vmem>>, vector<1x32xf32>
    %c0_30 = arith.constant 0 : index
    %c0_31 = arith.constant 0 : index
    %78 = vector.load %arg9[%c0_30, %c0_31] : memref<1x32xf32, #tpu.memory_space<vmem>>, vector<1x32xf32>
    %cst_32 = arith.constant dense<0.000000e+00> : vector<16xf32>
    %79 = vector.multi_reduction <add>, %76, %cst_32 [1] : vector<16x32xf32> to vector<16xf32>
    %80 = vector.shape_cast %79 : vector<16xf32> to vector<16x1xf32>
    %cst_33 = arith.constant 3.200000e+01 : f32
    %81 = vector.broadcast %cst_33 : f32 to vector<16x1xf32>
    %82 = arith.divf %80, %81 : vector<16x1xf32>
    %83 = vector.broadcast %82 : vector<16x1xf32> to vector<16x32xf32>
    %84 = arith.subf %76, %83 : vector<16x32xf32>
    %85 = arith.mulf %84, %84 : vector<16x32xf32>
    %cst_34 = arith.constant dense<0.000000e+00> : vector<16xf32>
    %86 = vector.multi_reduction <add>, %85, %cst_34 [1] : vector<16x32xf32> to vector<16xf32>
    %87 = vector.shape_cast %86 : vector<16xf32> to vector<16x1xf32>
    %cst_35 = arith.constant 3.200000e+01 : f32
    %88 = vector.broadcast %cst_35 : f32 to vector<16x1xf32>
    %89 = arith.divf %87, %88 : vector<16x1xf32>
    %90 = vector.broadcast %82 : vector<16x1xf32> to vector<16x32xf32>
    %91 = arith.subf %76, %90 : vector<16x32xf32>
    %cst_36 = arith.constant 9.99999996E-13 : f32
    %92 = vector.broadcast %cst_36 : f32 to vector<16x1xf32>
    %93 = arith.addf %89, %92 : vector<16x1xf32>
    %94 = math.rsqrt %93 : vector<16x1xf32>
    %95 = vector.broadcast %94 : vector<16x1xf32> to vector<16x32xf32>
    %96 = arith.mulf %91, %95 : vector<16x32xf32>
    %97 = vector.broadcast %77 : vector<1x32xf32> to vector<16x32xf32>
    %98 = arith.mulf %96, %97 : vector<16x32xf32>
    %99 = vector.broadcast %78 : vector<1x32xf32> to vector<16x32xf32>
    %100 = arith.addf %98, %99 : vector<16x32xf32>
    %c0_37 = arith.constant 0 : index
    %c0_38 = arith.constant 0 : index
    %101 = vector.load %arg10[%c0_37, %c0_38] : memref<16x32xf32, #tpu.memory_space<vmem>>, vector<16x32xf32>
    tpu.vector_store %arg10[%c0_37, %c0_38], %100 {strides = array<i32>} : memref<16x32xf32, #tpu.memory_space<vmem>>, vector<16x32xf32>,
    return
  }
}

</mosaic_0001>

<llo_original>
// kernel: tpu_custom_call.1
$region0: #{tpu_custom_call.1}
  #allocation0 [shape = 'u32[]', space=smem, size = 0x4, offset = 0x4, fixed_abs, tag = 'smem constant byte address 0x4 - core index']
  #allocation1 [shape = 'u32[144,128]{1,0:T(1,128)}', space=vmem, size = 0x12000, scoped, tag = 'internal scratch']
  %s0 = inlined_call_operand.vmem [shape: f32[16,32], index: 0, kind: input, shape index: {}]
  %s1 = inlined_call_operand.vmem [shape: f32[3,32], index: 1, kind: input, shape index: {}]
  %s2 = inlined_call_operand.vmem [shape: f32[1,32], index: 2, kind: input, shape index: {}]
  %s3 = inlined_call_operand.vmem [shape: f32[1,32], index: 3, kind: input, shape index: {}]
  %s4 = inlined_call_operand.vmem [shape: f32[32,64], index: 4, kind: input, shape index: {}]
  %s5 = inlined_call_operand.vmem [shape: f32[1,64], index: 5, kind: input, shape index: {}]
  %s6 = inlined_call_operand.vmem [shape: f32[64,32], index: 6, kind: input, shape index: {}]
  %s7 = inlined_call_operand.vmem [shape: f32[1,32], index: 7, kind: input, shape index: {}]
  %s8 = inlined_call_operand.vmem [shape: f32[1,32], index: 8, kind: input, shape index: {}]
  %s9 = inlined_call_operand.vmem [shape: f32[1,32], index: 9, kind: input, shape index: {}]
  %s10 = inlined_call_operand.hbm [shape: f32[16,32], index: 10, kind: output, shape index: {}]
  %s11 = sld [smem:[#allocation0]]
  $region50: #{tpu_custom_call.1} parent=0
    _
  %s13 = ssub.s32 1, %s11
  %s14 = scalar_select 0, %s13, %s11
  $region1: #{tpu_custom_call.1} parent=0
    #allocation2 [shape = 'u8[8192]{0}', space=vmem, size = 0x2000, scoped, tag = 'output window, operand 0, single buffered']
    #allocation3 [shape = 's32[1]{0}', space=sflag, size = 0x4, scoped, tag = 'scoped memory for tpu_custom_call.1']
    %15 = vsyncpa [#allocation3], 0
    // Predicated region
    $region2: #{tpu_custom_call.1} parent=1 // pred_check
      _
    $region3: #{tpu_custom_call.1} parent=1 // pred_check_branch
      %17 = sbr.rel (0) target = $region5
    $region4: #{tpu_custom_call.1} parent=1 // pred_region
      _
    $region5: #{tpu_custom_call.1} parent=1 // pred_fallthru
      _
    // Predicated region
    $region6: #{tpu_custom_call.1} parent=1 // pred_check
      _
    $region7: #{tpu_custom_call.1} parent=1 // pred_check_branch
      %19 = sbr.rel (0) target = $region9
    $region8: #{tpu_custom_call.1} parent=1 // pred_region
      _
    $region9: #{tpu_custom_call.1} parent=1 // pred_fallthru
      _
    // Predicated region
    $region10: #{tpu_custom_call.1} parent=1 // pred_check
      _
    $region11: #{tpu_custom_call.1} parent=1 // pred_check_branch
      %21 = sbr.rel (0) target = $region13
    $region12: #{tpu_custom_call.1} parent=1 // pred_region
      _
    $region13: #{tpu_custom_call.1} parent=1 // pred_fallthru
      _
    // Predicated region
    $region14: #{tpu_custom_call.1} parent=1 // pred_check
      _
    $region15: #{tpu_custom_call.1} parent=1 // pred_check_branch
      %23 = sbr.rel (0) target = $region17
    $region16: #{tpu_custom_call.1} parent=1 // pred_region
      _
    $region17: #{tpu_custom_call.1} parent=1 // pred_fallthru
      _
    // Predicated region
    $region18: #{tpu_custom_call.1} parent=1 // pred_check
      _
    $region19: #{tpu_custom_call.1} parent=1 // pred_check_branch
      %25 = sbr.rel (0) target = $region21
    $region20: #{tpu_custom_call.1} parent=1 // pred_region
      _
    $region21: #{tpu_custom_call.1} parent=1 // pred_fallthru
      _
    // Predicated region
    $region22: #{tpu_custom_call.1} parent=1 // pred_check
      _
    $region23: #{tpu_custom_call.1} parent=1 // pred_check_branch
      %27 = sbr.rel (0) target = $region25
    $region24: #{tpu_custom_call.1} parent=1 // pred_region
      _
    $region25: #{tpu_custom_call.1} parent=1 // pred_fallthru
      _
    // Predicated region
    $region26: #{tpu_custom_call.1} parent=1 // pred_check
      _
    $region27: #{tpu_custom_call.1} parent=1 // pred_check_branch
      %29 = sbr.rel (0) target = $region29
    $region28: #{tpu_custom_call.1} parent=1 // pred_region
      _
    $region29: #{tpu_custom_call.1} parent=1 // pred_fallthru
      _
    // Predicated region
    $region30: #{tpu_custom_call.1} parent=1 // pred_check
      _
    $region31: #{tpu_custom_call.1} parent=1 // pred_check_branch
      %31 = sbr.rel (0) target = $region33
    $region32: #{tpu_custom_call.1} parent=1 // pred_region
      _
    $region33: #{tpu_custom_call.1} parent=1 // pred_fallthru
      _
    // Predicated region
    $region34: #{tpu_custom_call.1} parent=1 // pred_check
      _
    $region35: #{tpu_custom_call.1} parent=1 // pred_check_branch
      %33 = sbr.rel (0) target = $region37
    $region36: #{tpu_custom_call.1} parent=1 // pred_region
      _
    $region37: #{tpu_custom_call.1} parent=1 // pred_fallthru
      _
    // Predicated region
    $region38: #{tpu_custom_call.1} parent=1 // pred_check
      _
    $region39: #{tpu_custom_call.1} parent=1 // pred_check_branch
      %35 = sbr.rel (0) target = $region41
    $region40: #{tpu_custom_call.1} parent=1 // pred_region
      _
    $region41: #{tpu_custom_call.1} parent=1 // pred_fallthru
      _
    %v36 = vld [vmem:[%s0] sm:$0xff]
    %v37 = vld [vmem:[%s0 + $0x8] sm:$0xff]
    %v38 = vld [vmem:[%s1] sm:$0x7]
    %v39 = vlaneseq
    %v40 = vshrl.u32 %v39, 7
    %v41 = vsub.s32 0, %v40
    %v42 = vrot.slane %v38, %v41
    %v43 = vlaneseq
    %v44 = vshrl.u32 %v43, 7
    %v45 = vsub.s32 1, %v44
    %v46 = vrot.slane %v38, %v45
    %v47 = vlaneseq
    %v48 = vshrl.u32 %v47, 7
    %v49 = vsub.s32 2, %v48
    %v50 = vrot.slane %v38, %v49
    %v51 = vmul.f32 %v42, %v36
    %v52 = vrot.slane %v36, 7
    %v53 = vmul.f32 %v46, %v52
    %v54 = vadd.f32 %v51, %v53
    %v55 = vrot.slane %v36, 6
    %v56 = vmul.f32 %v50, %v55
    %v57 = vadd.f32 %v54, %v56
    %v58 = vmul.f32 %v57, 0.35355338
    %v59 = vadd.f32 %v58, %v36
    %v60 = vmul.f32 %v42, %v37
    %v61 = vrot.slane %v37, 7
    %v62 = vmul.f32 %v46, %v61
    %v63 = vadd.f32 %v60, %v62
    %v64 = vrot.slane %v37, 6
    %v65 = vmul.f32 %v50, %v64
    %v66 = vadd.f32 %v63, %v65
    %v67 = vmul.f32 %v66, 0.35355338
    %v68 = vadd.f32 %v67, %v37
    %v69 = vld [vmem:[%s2] sm:$0x1]
    %v70 = vld [vmem:[%s3] sm:$0x1]
    %vm71 = vcmask 261120
    %v72 = vsel %vm71, %v59, 0.0
    %73 = vadd.xlane.f32.xlu0 %v72
    %v74 = vpop.xlane.xlu0 %73
    %v75 = vsel %vm71, %v68, 0.0
    %76 = vadd.xlane.f32.xlu0 %v75
    %v77 = vpop.xlane.xlu0 %76
    %v78 = vrcp.pop 32.0
    %v79 = vmul.f32 %v74, %v78
    %v80 = vmul.f32 %v77, %v78
    %v81 = vsub.f32 %v59, %v79
    %v82 = vsub.f32 %v68, %v80
    %v83 = vmul.f32 %v81, %v81
    %v84 = vmul.f32 %v82, %v82
    %v85 = vsel %vm71, %v83, 0.0
    %86 = vadd.xlane.f32.xlu0 %v85
    %v87 = vpop.xlane.xlu0 %86
    %v88 = vsel %vm71, %v84, 0.0
    %89 = vadd.xlane.f32.xlu0 %v88
    %v90 = vpop.xlane.xlu0 %89
    %v91 = vmul.f32 %v87, %v78
    %v92 = vmul.f32 %v90, %v78
    %v93 = vadd.f32 %v91, 1e-12
    %v94 = vadd.f32 %v92, 1e-12
    %v95 = vrsqrt.pop %v93
    %v96 = vrsqrt.pop %v94
    %v97 = vmul.f32 %v81, %v95
    %v98 = vmul.f32 %v82, %v96
    %v100 = vlaneseq
    %v101 = vshrl.u32 %v100, 7
    %v102 = vsub.s32 0, %v101
    %v103 = vrot.slane %v69, %v102
    %v105 = vmul.f32 %v97, %v103
    %v106 = vmul.f32 %v98, %v103
    %v108 = vlaneseq
    %v109 = vshrl.u32 %v108, 7
    %v110 = vsub.s32 0, %v109
    %v111 = vrot.slane %v70, %v110
    %v113 = vadd.f32 %v105, %v111
    %v114 = vadd.f32 %v106, %v111
    %v115 = vld [vmem:[%s4] sm:$0xff]
    %v116 = vld [vmem:[%s4 + $0x8] sm:$0xff]
    %v117 = vld [vmem:[%s4 + $0x10] sm:$0xff]
    %v118 = vld [vmem:[%s4 + $0x18] sm:$0xff]
    %v119 = vld [vmem:[%s5] sm:$0x1]
    %v121 = vlaneseq
    %v122 = vshrl.u32 %v121, 7
    %v123 = vsub.s32 0, %v122
    %v124 = vrot.slane %v119, %v123
    %v127 = vsel %vm71, %v113, 0
    %v130 = vsel %vm71, %v114, 0
    %132 = vmatprep.subr.mxu0 0.0
    %133 = vmatpush1.msra.mxu0 %v115
    %134 = vmatprep.subr.mxu0 0.0
    %135 = vmatpush1.msra.mxu0 %v116
    %136 = vmatprep.subr.mxu0 0.0
    %137 = vmatpush1.msra.mxu0 %v117
    %138 = vmatprep.subr.mxu0 0.0
    %139 = vmatpush1.msra.mxu0 %v118
    %140 = vmatprep.subr.mxu0 0.0
    %141 = vmatpush1.msra.mxu0 0.0
    %142 = vmatprep.subr.mxu0 0.0
    %143 = vmatpush1.msra.mxu0 0.0
    %144 = vmatprep.subr.mxu0 0.0
    %145 = vmatpush1.msra.mxu0 0.0
    %146 = vmatprep.subr.mxu0 0.0
    %147 = vmatpush1.msra.mxu0 0.0
    %148 = vmatprep.subr.mxu0 0.0
    %149 = vmatpush1.msra.mxu0 0.0
    %150 = vmatprep.subr.mxu0 0.0
    %151 = vmatpush1.msra.mxu0 0.0
    %152 = vmatprep.subr.mxu0 0.0
    %153 = vmatpush1.msra.mxu0 0.0
    %154 = vmatprep.subr.mxu0 0.0
    %155 = vmatpush1.msra.mxu0 0.0
    %156 = vmatprep.subr.mxu0 0.0
    %157 = vmatpush1.msra.mxu0 0.0
    %158 = vmatprep.subr.mxu0 0.0
    %159 = vmatpush1.msra.mxu0 0.0
    %160 = vmatprep.subr.mxu0 0.0
    %161 = vmatpush1.msra.mxu0 0.0
    %162 = vmatprep.subr.mxu0 0.0
    %163 = vmatpush1.msra.mxu0 0.0
    %164 = vmatprep.subr.mxu0 0.0
    %165 = vmatpush1.msra.mxu0 0.0
    %166 = vmatprep.subr.mxu0 0.0
    %167 = vmatpush1.msra.mxu0 0.0
    %168 = vmatprep.subr.mxu0 0.0
    %169 = vmatpush1.msra.mxu0 0.0
    %170 = vmatprep.subr.mxu0 0.0
    %171 = vmatpush1.msra.mxu0 0.0
    %172 = vmatprep.subr.mxu0 0.0
    %173 = vmatpush1.msra.mxu0 0.0
    %174 = vmatprep.subr.mxu0 0.0
    %175 = vmatpush1.msra.mxu0 0.0
    %176 = vmatprep.subr.mxu0 0.0
    %177 = vmatpush1.msra.mxu0 0.0
    %178 = vmatprep.subr.mxu0 0.0
    %179 = vmatpush1.msra.mxu0 0.0
    %180 = vmatprep.subr.mxu0 0.0
    %181 = vmatpush1.msra.mxu0 0.0
    %182 = vmatprep.subr.mxu0 0.0
    %183 = vmatpush1.msra.mxu0 0.0
    %184 = vmatprep.subr.mxu0 0.0
    %185 = vmatpush1.msra.mxu0 0.0
    %186 = vmatprep.subr.mxu0 0.0
    %187 = vmatpush1.msra.mxu0 0.0
    %188 = vmatprep.subr.mxu0 0.0
    %189 = vmatpush1.msra.mxu0 0.0
    %190 = vmatprep.subr.mxu0 0.0
    %191 = vmatpush1.msra.mxu0 0.0
    %192 = vmatprep.subr.mxu0 0.0
    %193 = vmatpush1.msra.mxu0 0.0
    %194 = vmatprep.subr.mxu0 0.0
    %195 = vmatpush1.msra.mxu0 0.0
    %196 = vmatprep.mubr.f32.mxu0 0.0
    %197 = vmatmul.mubr.f32.gmra.mrb[0].mxu0 %v127
    %v198 = vpop.f32.mrb[0].mxu0
    %v199 = vadd.f32 %v124, %v198
    %v200 = vpop.f32.mrb[0].mxu0
    %201 = vmatprep.mubr.f32.mxu0 0.0
    %202 = vmatmul.mubr.f32.gmra.mrb[0].mxu0 %v130
    %v203 = vpop.f32.mrb[0].mxu0
    %v204 = vadd.f32 %v124, %v203
    %v205 = vpop.f32.mrb[0].mxu0
    %206 = vdwg.mxu0
    %v207 = vmul.f32 %v199, 0.5
    %v208 = vmul.f32 %v204, 0.5
    %v209 = vmul.f32 %v199, 0.70710677
    %v210 = vmul.f32 %v204, 0.70710677
    %v211 = verf.f32.pop %v209
    %v212 = verf.f32.pop %v210
    %v213 = vadd.f32 %v211, 1.0
    %v214 = vadd.f32 %v212, 1.0
    %v215 = vmul.f32 %v207, %v213
    %v216 = vmul.f32 %v208, %v214
    %v217 = vld [vmem:[%s6] sm:$0xff]
    %v218 = vld [vmem:[%s6 + $0x8] sm:$0xff]
    %v219 = vld [vmem:[%s6 + $0x10] sm:$0xff]
    %v220 = vld [vmem:[%s6 + $0x18] sm:$0xff]
    %v221 = vld [vmem:[%s6 + $0x20] sm:$0xff]
    %v222 = vld [vmem:[%s6 + $0x28] sm:$0xff]
    %v223 = vld [vmem:[%s6 + $0x30] sm:$0xff]
    %v224 = vld [vmem:[%s6 + $0x38] sm:$0xff]
    %v225 = vld [vmem:[%s7] sm:$0x1]
    %v227 = vlaneseq
    %v228 = vshrl.u32 %v227, 7
    %v229 = vsub.s32 0, %v228
    %v230 = vrot.slane %v225, %v229
    %vm232 = vcmask 523264
    %v234 = vsel %vm232, %v215, 0
    %v237 = vsel %vm232, %v216, 0
    %239 = vmatprep.subr.mxu0 0.0
    %240 = vmatpush1.msra.mxu0 %v217
    %241 = vmatprep.subr.mxu0 0.0
    %242 = vmatpush1.msra.mxu0 %v218
    %243 = vmatprep.subr.mxu0 0.0
    %244 = vmatpush1.msra.mxu0 %v219
    %245 = vmatprep.subr.mxu0 0.0
    %246 = vmatpush1.msra.mxu0 %v220
    %247 = vmatprep.subr.mxu0 0.0
    %248 = vmatpush1.msra.mxu0 %v221
    %249 = vmatprep.subr.mxu0 0.0
    %250 = vmatpush1.msra.mxu0 %v222
    %251 = vmatprep.subr.mxu0 0.0
    %252 = vmatpush1.msra.mxu0 %v223
    %253 = vmatprep.subr.mxu0 0.0
    %254 = vmatpush1.msra.mxu0 %v224
    %255 = vmatprep.subr.mxu0 0.0
    %256 = vmatpush1.msra.mxu0 0.0
    %257 = vmatprep.subr.mxu0 0.0
    %258 = vmatpush1.msra.mxu0 0.0
    %259 = vmatprep.subr.mxu0 0.0
    %260 = vmatpush1.msra.mxu0 0.0
    %261 = vmatprep.subr.mxu0 0.0
    %262 = vmatpush1.msra.mxu0 0.0
    %263 = vmatprep.subr.mxu0 0.0
    %264 = vmatpush1.msra.mxu0 0.0
    %265 = vmatprep.subr.mxu0 0.0
    %266 = vmatpush1.msra.mxu0 0.0
    %267 = vmatprep.subr.mxu0 0.0
    %268 = vmatpush1.msra.mxu0 0.0
    %269 = vmatprep.subr.mxu0 0.0
    %270 = vmatpush1.msra.mxu0 0.0
    %271 = vmatprep.subr.mxu0 0.0
    %272 = vmatpush1.msra.mxu0 0.0
    %273 = vmatprep.subr.mxu0 0.0
    %274 = vmatpush1.msra.mxu0 0.0
    %275 = vmatprep.subr.mxu0 0.0
    %276 = vmatpush1.msra.mxu0 0.0
    %277 = vmatprep.subr.mxu0 0.0
    %278 = vmatpush1.msra.mxu0 0.0
    %279 = vmatprep.subr.mxu0 0.0
    %280 = vmatpush1.msra.mxu0 0.0
    %281 = vmatprep.subr.mxu0 0.0
    %282 = vmatpush1.msra.mxu0 0.0
    %283 = vmatprep.subr.mxu0 0.0
    %284 = vmatpush1.msra.mxu0 0.0
    %285 = vmatprep.subr.mxu0 0.0
    %286 = vmatpush1.msra.mxu0 0.0
    %287 = vmatprep.subr.mxu0 0.0
    %288 = vmatpush1.msra.mxu0 0.0
    %289 = vmatprep.subr.mxu0 0.0
    %290 = vmatpush1.msra.mxu0 0.0
    %291 = vmatprep.subr.mxu0 0.0
    %292 = vmatpush1.msra.mxu0 0.0
    %293 = vmatprep.subr.mxu0 0.0
    %294 = vmatpush1.msra.mxu0 0.0
    %295 = vmatprep.subr.mxu0 0.0
    %296 = vmatpush1.msra.mxu0 0.0
    %297 = vmatprep.subr.mxu0 0.0
    %298 = vmatpush1.msra.mxu0 0.0
    %299 = vmatprep.subr.mxu0 0.0
    %300 = vmatpush1.msra.mxu0 0.0
    %301 = vmatprep.subr.mxu0 0.0
    %302 = vmatpush1.msra.mxu0 0.0
    %303 = vmatprep.mubr.f32.mxu0 0.0
    %304 = vmatmul.mubr.f32.gmra.mrb[0].mxu0 %v234
    %v305 = vpop.f32.mrb[0].mxu0
    %v306 = vadd.f32 %v230, %v305
    %v307 = vpop.f32.mrb[0].mxu0
    %308 = vmatprep.mubr.f32.mxu0 0.0
    %309 = vmatmul.mubr.f32.gmra.mrb[0].mxu0 %v237
    %v310 = vpop.f32.mrb[0].mxu0
    %v311 = vadd.f32 %v230, %v310
    %v312 = vpop.f32.mrb[0].mxu0
    %313 = vdwg.mxu0
    %v314 = vadd.f32 %v306, %v113
    %v315 = vadd.f32 %v311, %v114
    %v316 = vld [vmem:[%s8] sm:$0x1]
    %v317 = vld [vmem:[%s9] sm:$0x1]
    %v318 = vsel %vm71, %v314, 0.0
    %319 = vadd.xlane.f32.xlu0 %v318
    %v320 = vpop.xlane.xlu0 %319
    %v321 = vsel %vm71, %v315, 0.0
    %322 = vadd.xlane.f32.xlu0 %v321
    %v323 = vpop.xlane.xlu0 %322
    %v324 = vmul.f32 %v320, %v78
    %v325 = vmul.f32 %v323, %v78
    %v326 = vsub.f32 %v314, %v324
    %v327 = vsub.f32 %v315, %v325
    %v328 = vmul.f32 %v326, %v326
    %v329 = vmul.f32 %v327, %v327
    %v330 = vsel %vm71, %v328, 0.0
    %331 = vadd.xlane.f32.xlu0 %v330
    %v332 = vpop.xlane.xlu0 %331
    %v333 = vsel %vm71, %v329, 0.0
    %334 = vadd.xlane.f32.xlu0 %v333
    %v335 = vpop.xlane.xlu0 %334
    %v336 = vmul.f32 %v332, %v78
    %v337 = vmul.f32 %v335, %v78
    %v338 = vadd.f32 %v336, 1e-12
    %v339 = vadd.f32 %v337, 1e-12
    %v340 = vrsqrt.pop %v338
    %v341 = vrsqrt.pop %v339
    %v342 = vmul.f32 %v326, %v340
    %v343 = vmul.f32 %v327, %v341
    %v345 = vlaneseq
    %v346 = vshrl.u32 %v345, 7
    %v347 = vsub.s32 0, %v346
    %v348 = vrot.slane %v316, %v347
    %v350 = vmul.f32 %v342, %v348
    %v351 = vmul.f32 %v343, %v348
    %v353 = vlaneseq
    %v354 = vshrl.u32 %v353, 7
    %v355 = vsub.s32 0, %v354
    %v356 = vrot.slane %v317, %v355
    %v358 = vadd.f32 %v350, %v356
    %v359 = vadd.f32 %v351, %v356
    %360 = vst.msk [vmem:[#allocation2] sm:$0xff] %vm71, %v358
    %361 = vst.msk [vmem:[#allocation2 + $0x8] sm:$0xff] %vm71, %v359
    // Predicated region
    $region42: #{tpu_custom_call.1} parent=1 // pred_check
      _
    $region43: #{tpu_custom_call.1} parent=1 // pred_check_branch
      %363 = sbr.rel (0) target = $region45
    $region44: #{tpu_custom_call.1} parent=1 // pred_region
      %s365 = ssub.s32 256, 256
      %366 = vsyncadd [#allocation3], %s365
      %s367 = sshll.u32 [#allocation2], 4
      %s368 = int_to_ptr.vmem [resolvable:$true] %s367
      %373 = dma.vmem_to_hbm [thread:$0]  %s368, 256, %s10, [#allocation3], 128, 128, 8
    $region45: #{tpu_custom_call.1} parent=1 // pred_fallthru
      _
    // Predicated region
    $region46: #{tpu_custom_call.1} parent=1 // pred_check
      _
    $region47: #{tpu_custom_call.1} parent=1 // pred_check_branch
      %375 = sbr.rel (0) target = $region49
    $region48: #{tpu_custom_call.1} parent=1 // pred_region
      %376 = dma.done [#allocation3], 256
    $region49: #{tpu_custom_call.1} parent=1 // pred_fallthru
      _
    %377 = vsyncpa [#allocation3], 1

</llo_original>
